<compile_context>
chip_gen: v7x
topology: tpu7x:2x2x1
jax: 0.10.0
libtpu: 0.0.40
codegen_flags: <defaults>
</compile_context>

<pallas_src>
import functools
import math

import jax
import jax.numpy as jnp
from jax.experimental import pallas as pl
from jax.experimental.pallas import tpu as pltpu

IMG_DIM = 28 * 28  # 784
H1 = 256           # first hidden width
H2 = 128           # second hidden width
NEG_SLOPE = 0.2


def _round_up(n, m):
    return (n + m - 1) // m * m


def _disc_kernel(x_ref, w1_ref, b1_ref, w2_ref, b2_ref, w3_ref, b3_ref, o_ref):
    """Fused 3-layer MLP tile: bf16 MXU matmuls, f32 accumulation, f32 head."""
    x = x_ref[...]                                                    # (TB, 784) bf16

    # Linear(784 -> 256) + LeakyReLU(0.2)
    h1 = jnp.dot(x, w1_ref[...], preferred_element_type=jnp.float32)
    h1 = h1 + b1_ref[...]                                             # (TB, 256) f32
    h1 = jnp.maximum(h1, NEG_SLOPE * h1).astype(jnp.bfloat16)

    # Linear(256 -> 128) + LeakyReLU(0.2)
    h2 = jnp.dot(h1, w2_ref[...], preferred_element_type=jnp.float32)
    h2 = h2 + b2_ref[...]                                             # (TB, 128) f32
    h2 = jnp.maximum(h2, NEG_SLOPE * h2)                              # stays f32

    # Linear(128 -> 1) + Sigmoid: single output column -> VPU mul + XLU lane
    # reduce (no MXU pass padded to 128 lanes, no padded writeback).
    z = jnp.sum(h2 * w3_ref[...], axis=-1, keepdims=True) + b3_ref[...]   # (TB, 1) f32
    o_ref[...] = jax.nn.sigmoid(z).astype(o_ref.dtype)


@functools.partial(jax.jit, static_argnames=("tb",))
def discriminator_forward(x, prepared, tb=1024):
    """x: (B, D) float32 or bfloat16. prepared: output of prepare_params().

    Returns (B, 1) float32 = sigmoid(MLP(x)), matching the PyTorch module.
    """
    B, D = x.shape
    w1, b1 = prepared["w1"], prepared["b1"]
    w2, b2 = prepared["w2"], prepared["b2"]
    w3, b3 = prepared["w3"], prepared["b3"]
    assert w1.shape[0] == D

    # Only cast (no K pad, no buffer rebuild). No-op if caller passes bf16.
    x = x.astype(jnp.bfloat16)

    # Batch tile: big enough to amortize the ~0.35 us per-grid-step overhead,
    # small enough to fit the 32 MiB scoped-VMEM default on every generation
    # (TB=1024 -> ~2x1.5 MiB x double-buffered + <1 MiB weights + ~1.5 MiB
    # intermediates). For tiny batches round up to 16 (bf16 sublane packing).
    TB = min(tb, _round_up(B, 16))
    # v7x: the grid is the only mechanism that feeds the second TensorCore —
    # keep >=4 grid steps at large B (never below 256 rows/step).
    if B >= 4 * 256:
        TB = min(TB, max(256, _round_up(pl.cdiv(B, 4), 16)))
    B_pad = _round_up(B, TB)
    if B_pad != B:
        x = jnp.pad(x, ((0, B_pad - B), (0, 0)))
    grid = (B_pad // TB,)

    flops = 2 * B_pad * (D * H1 + H1 * H2 + H2)
    transcendentals = B_pad  # one sigmoid per row
    bytes_accessed = (
        B_pad * D * 2                      # x read (bf16)
        + w1.size * 2 + w2.size * 2        # bf16 weights
        + (b1.size + b2.size + w3.size + b3.size) * 4
        + B_pad * 4                        # (B_pad, 1) f32 output
    )

    out = pl.pallas_call(
        _disc_kernel,
        out_shape=jax.ShapeDtypeStruct((B_pad, 1), jnp.float32),
        grid=grid,
        in_specs=[
            pl.BlockSpec((TB, D), lambda i: (i, 0)),     # x: tiled over batch
            pl.BlockSpec((D, H1), lambda i: (0, 0)),     # w1: VMEM-resident
            pl.BlockSpec((1, H1), lambda i: (0, 0)),     # b1
            pl.BlockSpec((H1, H2), lambda i: (0, 0)),    # w2
            pl.BlockSpec((1, H2), lambda i: (0, 0)),     # b2
            pl.BlockSpec((1, H2), lambda i: (0, 0)),     # w3 (row vector, f32)
            pl.BlockSpec((1, 1), lambda i: (0, 0)),      # b3 (scalar)
        ],
        out_specs=pl.BlockSpec((TB, 1), lambda i: (i, 0)),
        compiler_params=pltpu.CompilerParams(
            dimension_semantics=("parallel",),
        ),
        cost_estimate=pl.CostEstimate(
            flops=flops,
            transcendentals=transcendentals,
            bytes_accessed=bytes_accessed,
        ),
    )(x, w1, b1, w2, b2, w3, b3)

    return out[:B]


def prepare_params(params):
    """One-time cast/reshape of f32 (in,out) params into kernel layout."""
    return dict(
        w1=params["w1"].astype(jnp.bfloat16),               # (784, 256) bf16
        b1=params["b1"].reshape(1, H1).astype(jnp.float32),  # (1, 256) f32
        w2=params["w2"].astype(jnp.bfloat16),                # (256, 128) bf16
        b2=params["b2"].reshape(1, H2).astype(jnp.float32),  # (1, 128) f32
        w3=params["w3"].reshape(1, H2).astype(jnp.float32),  # (1, 128) f32 row
        b3=params["b3"].reshape(1, 1).astype(jnp.float32),   # (1, 1) f32
    )


def init_params(key, img_dim=IMG_DIM):
    """Deterministic init matching nn.Linear's default U(-1/sqrt(fan_in), +)."""
    dims = [(img_dim, H1), (H1, H2), (H2, 1)]
    params = {}
    for i, (fan_in, fan_out) in enumerate(dims, start=1):
        key, kw, kb = jax.random.split(key, 3)
        bound = 1.0 / math.sqrt(fan_in)
        # stored as (in, out): transpose of torch's (out, in) weight layout
        params[f"w{i}"] = jax.random.uniform(
            kw, (fan_in, fan_out), jnp.float32, -bound, bound)
        params[f"b{i}"] = jax.random.uniform(
            kb, (1, fan_out), jnp.float32, -bound, bound)
    return params


def _reference_forward_f32(x, params):
    """Pure-JAX f32 reference (exact module semantics)."""
    h = x @ params["w1"] + params["b1"]
    h = jnp.where(h > 0, h, NEG_SLOPE * h)
    h = h @ params["w2"] + params["b2"]
    h = jnp.where(h > 0, h, NEG_SLOPE * h)
    z = h @ params["w3"] + params["b3"]
    return jax.nn.sigmoid(z)


def _reference_forward_mixed(x, params):
    """Pure-JAX reference with the kernel's mixed precision (bf16 layers 1-2,
    f32 accumulation, f32 final layer)."""
    h = jnp.dot(x.astype(jnp.bfloat16), params["w1"].astype(jnp.bfloat16),
                preferred_element_type=jnp.float32) + params["b1"]
    h = jnp.maximum(h, NEG_SLOPE * h).astype(jnp.bfloat16)
    h = jnp.dot(h, params["w2"].astype(jnp.bfloat16),
                preferred_element_type=jnp.float32) + params["b2"]
    h = jnp.maximum(h, NEG_SLOPE * h)
    z = h @ params["w3"] + params["b3"]
    return jax.nn.sigmoid(z)


if __name__ == "__main__":
    key = jax.random.PRNGKey(0)
    kx, kp = jax.random.split(key)

    params = init_params(kp, IMG_DIM)
    prepared = prepare_params(params)

    # Small batches: one aligned, one that exercises the batch-padding path.
    for batch in (8, 40):
        x = jax.random.normal(kx, (batch, IMG_DIM), dtype=jnp.float32)

        out = discriminator_forward(x, prepared)
        out = jax.block_until_ready(out)
        assert out.shape == (batch, 1), out.shape

        # Tight check vs a reference using the same mixed precision.
        ref_mixed = _reference_forward_mixed(x, params)
        assert jnp.allclose(out, ref_mixed, atol=2e-3, rtol=1e-3), \
            "mismatch vs mixed-precision reference"

        # Looser check vs the full-f32 module semantics.
        ref_f32 = _reference_forward_f32(x, params)
        assert jnp.allclose(out, ref_f32, atol=5e-2, rtol=5e-2), \
            "mismatch vs f32 reference"

    print("KERNEL_OK")
</pallas_src>

<mosaic_0001>
module attributes {stable_mosaic.version = 11 : i64} {
  func.func @_disc_kernel(%arg0: i32, %arg1: memref<16x784xbf16, #tpu.memory_space<vmem>>, %arg2: memref<784x256xbf16, #tpu.memory_space<vmem>>, %arg3: memref<1x256xf32, #tpu.memory_space<vmem>>, %arg4: memref<256x128xbf16, #tpu.memory_space<vmem>>, %arg5: memref<1x128xf32, #tpu.memory_space<vmem>>, %arg6: memref<1x128xf32, #tpu.memory_space<vmem>>, %arg7: memref<1x1xf32, #tpu.memory_space<vmem>>, %arg8: memref<16x1xf32, #tpu.memory_space<vmem>>) attributes {dimension_semantics = [#tpu.dimension_semantics<parallel>], iteration_bounds = array<i64: 1>, scalar_prefetch = 0 : i64, scratch_operands = 0 : i64, tpu.core_type = #tpu.core_type<tc>, window_params = [{transform_indices = @transform_0, window_bounds = array<i64: 16, 784>}, {pipeline_mode = #tpu.pipeline_mode<synchronous>, transform_indices = @transform_1, window_bounds = array<i64: 784, 256>}, {pipeline_mode = #tpu.pipeline_mode<synchronous>, transform_indices = @transform_2, window_bounds = array<i64: 1, 256>}, {pipeline_mode = #tpu.pipeline_mode<synchronous>, transform_indices = @transform_3, window_bounds = array<i64: 256, 128>}, {pipeline_mode = #tpu.pipeline_mode<synchronous>, transform_indices = @transform_4, window_bounds = array<i64: 1, 128>}, {pipeline_mode = #tpu.pipeline_mode<synchronous>, transform_indices = @transform_5, window_bounds = array<i64: 1, 128>}, {pipeline_mode = #tpu.pipeline_mode<synchronous>, transform_indices = @transform_6, window_bounds = array<i64: 1, 1>}, {transform_indices = @transform_7, window_bounds = array<i64: 16, 1>}]} {
    %c0 = arith.constant 0 : index
    %c0_0 = arith.constant 0 : index
    %0 = vector.load %arg1[%c0, %c0_0] : memref<16x784xbf16, #tpu.memory_space<vmem>>, vector<16x784xbf16>
    %c0_1 = arith.constant 0 : index
    %c0_2 = arith.constant 0 : index
    %1 = vector.load %arg2[%c0_1, %c0_2] : memref<784x256xbf16, #tpu.memory_space<vmem>>, vector<784x256xbf16>
    %cst = arith.constant dense<0.000000e+00> : vector<16x256xf32>
    %2 = tpu.matmul %0, %1, %cst {dimension_numbers = #tpu.dot_dimension_numbers<[1], [0], [0], [1], [0, 0, 1, 1], [], []>} : vector<16x784xbf16>, vector<784x256xbf16>, vector<16x256xf32> -> vector<16x256xf32>
    %c0_3 = arith.constant 0 : index
    %c0_4 = arith.constant 0 : index
    %3 = vector.load %arg3[%c0_3, %c0_4] : memref<1x256xf32, #tpu.memory_space<vmem>>, vector<1x256xf32>
    %4 = vector.broadcast %3 : vector<1x256xf32> to vector<16x256xf32>
    %5 = arith.addf %2, %4 : vector<16x256xf32>
    %cst_5 = arith.constant 2.000000e-01 : f32
    %6 = vector.broadcast %cst_5 : f32 to vector<16x256xf32>
    %7 = arith.mulf %6, %5 : vector<16x256xf32>
    %8 = arith.maximumf %5, %7 : vector<16x256xf32>
    %9 = arith.truncf %8 : vector<16x256xf32> to vector<16x256xbf16>
    %c0_6 = arith.constant 0 : index
    %c0_7 = arith.constant 0 : index
    %10 = vector.load %arg4[%c0_6, %c0_7] : memref<256x128xbf16, #tpu.memory_space<vmem>>, vector<256x128xbf16>
    %cst_8 = arith.constant dense<0.000000e+00> : vector<16x128xf32>
    %11 = tpu.matmul %9, %10, %cst_8 {dimension_numbers = #tpu.dot_dimension_numbers<[1], [0], [0], [1], [0, 0, 1, 1], [], []>} : vector<16x256xbf16>, vector<256x128xbf16>, vector<16x128xf32> -> vector<16x128xf32>
    %c0_9 = arith.constant 0 : index
    %c0_10 = arith.constant 0 : index
    %12 = vector.load %arg5[%c0_9, %c0_10] : memref<1x128xf32, #tpu.memory_space<vmem>>, vector<1x128xf32>
    %13 = vector.broadcast %12 : vector<1x128xf32> to vector<16x128xf32>
    %14 = arith.addf %11, %13 : vector<16x128xf32>
    %cst_11 = arith.constant 2.000000e-01 : f32
    %15 = vector.broadcast %cst_11 : f32 to vector<16x128xf32>
    %16 = arith.mulf %15, %14 : vector<16x128xf32>
    %17 = arith.maximumf %14, %16 : vector<16x128xf32>
    %c0_12 = arith.constant 0 : index
    %c0_13 = arith.constant 0 : index
    %18 = vector.load %arg6[%c0_12, %c0_13] : memref<1x128xf32, #tpu.memory_space<vmem>>, vector<1x128xf32>
    %19 = vector.broadcast %18 : vector<1x128xf32> to vector<16x128xf32>
    %20 = arith.mulf %17, %19 : vector<16x128xf32>
    %cst_14 = arith.constant dense<0.000000e+00> : vector<16xf32>
    %21 = vector.multi_reduction <add>, %20, %cst_14 [1] : vector<16x128xf32> to vector<16xf32>
    %22 = vector.shape_cast %21 : vector<16xf32> to vector<16x1xf32>
    %c0_15 = arith.constant 0 : index
    %c0_16 = arith.constant 0 : index
    %23 = vector.load %arg7[%c0_15, %c0_16] : memref<1x1xf32, #tpu.memory_space<vmem>>, vector<1x1xf32>
    %24 = vector.broadcast %23 : vector<1x1xf32> to vector<16x1xf32>
    %25 = arith.addf %22, %24 : vector<16x1xf32>
    %26 = arith.negf %25 : vector<16x1xf32>
    %27 = math.exp %26 : vector<16x1xf32>
    %cst_17 = arith.constant 1.000000e+00 : f32
    %28 = vector.broadcast %cst_17 : f32 to vector<16x1xf32>
    %29 = arith.addf %28, %27 : vector<16x1xf32>
    %30 = arith.divf %28, %29 : vector<16x1xf32>
    %c0_18 = arith.constant 0 : index
    %c0_19 = arith.constant 0 : index
    %31 = vector.load %arg8[%c0_18, %c0_19] : memref<16x1xf32, #tpu.memory_space<vmem>>, vector<16x1xf32>
    tpu.vector_store %arg8[%c0_18, %c0_19], %30 {strides = array<i32>} : memref<16x1xf32, #tpu.memory_space<vmem>>, vector<16x1xf32>,
    return
  }
  func.func @transform_0(%arg0: i32) -> (i32, i32) {
    %c0_i32 = arith.constant 0 : i32
    %c0_i32_0 = arith.constant 0 : i32
    return %arg0, %c0_i32 : i32, i32
  }
  func.func @transform_1(%arg0: i32) -> (i32, i32) {
    %c0_i32 = arith.constant 0 : i32
    %c0_i32_0 = arith.constant 0 : i32
    %c0_i32_1 = arith.constant 0 : i32
    return %c0_i32, %c0_i32_0 : i32, i32
  }
  func.func @transform_2(%arg0: i32) -> (i32, i32) {
    %c0_i32 = arith.constant 0 : i32
    %c0_i32_0 = arith.constant 0 : i32
    %c0_i32_1 = arith.constant 0 : i32
    return %c0_i32, %c0_i32_0 : i32, i32
  }
  func.func @transform_3(%arg0: i32) -> (i32, i32) {
    %c0_i32 = arith.constant 0 : i32
    %c0_i32_0 = arith.constant 0 : i32
    %c0_i32_1 = arith.constant 0 : i32
    return %c0_i32, %c0_i32_0 : i32, i32
  }
  func.func @transform_4(%arg0: i32) -> (i32, i32) {
    %c0_i32 = arith.constant 0 : i32
    %c0_i32_0 = arith.constant 0 : i32
    %c0_i32_1 = arith.constant 0 : i32
    return %c0_i32, %c0_i32_0 : i32, i32
  }
  func.func @transform_5(%arg0: i32) -> (i32, i32) {
    %c0_i32 = arith.constant 0 : i32
    %c0_i32_0 = arith.constant 0 : i32
    %c0_i32_1 = arith.constant 0 : i32
    return %c0_i32, %c0_i32_0 : i32, i32
  }
  func.func @transform_6(%arg0: i32) -> (i32, i32) {
    %c0_i32 = arith.constant 0 : i32
    %c0_i32_0 = arith.constant 0 : i32
    %c0_i32_1 = arith.constant 0 : i32
    return %c0_i32, %c0_i32_0 : i32, i32
  }
  func.func @transform_7(%arg0: i32) -> (i32, i32) {
    %c0_i32 = arith.constant 0 : i32
    %c0_i32_0 = arith.constant 0 : i32
    return %arg0, %c0_i32 : i32, i32
  }
}

</mosaic_0001>

<llo_original>
// kernel: discriminator_forward.1
$region0: #{discriminator_forward.1}
  #allocation0 [shape = 'u32[]', space=smem, size = 0x4, offset = 0x4, fixed_abs, tag = 'smem constant byte address 0x4 - core index']
  #allocation1 [shape = 'u32[144,128]{1,0:T(1,128)}', space=vmem, size = 0x12000, scoped, tag = 'internal scratch']
  #allocation2 [shape = 'f32[1,1]{1,0:T(1,128)S(1)}', space=vmem, size = 0x200, scoped, tag = 'scoped memory for discriminator_forward.1']
  %s0 = inlined_call_operand.vmem [shape: bf16[16,784], index: 0, kind: input, shape index: {}]
  %s1 = inlined_call_operand.hbm [shape: bf16[784,256], index: 1, kind: input, shape index: {}]
  %s2 = inlined_call_operand.vmem [shape: f32[1,256], index: 2, kind: input, shape index: {}]
  %s3 = inlined_call_operand.vmem [shape: bf16[256,128], index: 3, kind: input, shape index: {}]
  %s4 = inlined_call_operand.vmem [shape: f32[1,128], index: 4, kind: input, shape index: {}]
  %s5 = inlined_call_operand.vmem [shape: f32[1,128], index: 5, kind: input, shape index: {}]
  %s6 = inlined_call_operand.<no memory space> [shape: f32[1,1], index: 6, kind: input, shape index: {}]
  %s7 = inlined_call_operand.vmem [shape: f32[16,1], index: 7, kind: output, shape index: {}]
  %s8 = sld [smem:[#allocation0]]
  $region42: #{discriminator_forward.1} parent=0
    _
  %s10 = ssub.s32 1, %s8
  %s11 = scalar_select 0, %s10, %s8
  %v12 = vstv %s6
  %13 = vst [vmem:[#allocation2] sm:$0x1] %v12
  $region1: #{discriminator_forward.1} parent=0
    #allocation3 [shape = 'u8[401408]{0}', space=vmem, size = 0x62000, scoped, tag = 'input window, operand 1, single buffered']
    #allocation4 [shape = 's32[1]{0}', space=sflag, size = 0x4, scoped, tag = 'scoped memory for discriminator_forward.1']
    %14 = vsyncpa [#allocation4], 0
    // Predicated region
    $region2: #{discriminator_forward.1} parent=1 // pred_check
      _
    $region3: #{discriminator_forward.1} parent=1 // pred_check_branch
      %16 = sbr.rel (0) target = $region5
    $region4: #{discriminator_forward.1} parent=1 // pred_region
      _
    $region5: #{discriminator_forward.1} parent=1 // pred_fallthru
      _
    // Predicated region
    $region6: #{discriminator_forward.1} parent=1 // pred_check
      _
    $region7: #{discriminator_forward.1} parent=1 // pred_check_branch
      %18 = sbr.rel (0) target = $region9
    $region8: #{discriminator_forward.1} parent=1 // pred_region
      %s20 = ssub.s32 12544, 12544
      %21 = vsyncadd [#allocation4], %s20
      %s22 = sshll.u32 [#allocation3], 4
      %s23 = int_to_ptr.vmem [resolvable:$true] %s22
      %28 = dma.hbm_to_vmem [thread:$0]  %s1, 12544, %s23, [#allocation4], 128, 128, 8
    $region9: #{discriminator_forward.1} parent=1 // pred_fallthru
      _
    // Predicated region
    $region10: #{discriminator_forward.1} parent=1 // pred_check
      _
    $region11: #{discriminator_forward.1} parent=1 // pred_check_branch
      %30 = sbr.rel (0) target = $region13
    $region12: #{discriminator_forward.1} parent=1 // pred_region
      _
    $region13: #{discriminator_forward.1} parent=1 // pred_fallthru
      _
    // Predicated region
    $region14: #{discriminator_forward.1} parent=1 // pred_check
      _
    $region15: #{discriminator_forward.1} parent=1 // pred_check_branch
      %32 = sbr.rel (0) target = $region17
    $region16: #{discriminator_forward.1} parent=1 // pred_region
      _
    $region17: #{discriminator_forward.1} parent=1 // pred_fallthru
      _
    // Predicated region
    $region18: #{discriminator_forward.1} parent=1 // pred_check
      _
    $region19: #{discriminator_forward.1} parent=1 // pred_check_branch
      %34 = sbr.rel (0) target = $region21
    $region20: #{discriminator_forward.1} parent=1 // pred_region
      _
    $region21: #{discriminator_forward.1} parent=1 // pred_fallthru
      _
    // Predicated region
    $region22: #{discriminator_forward.1} parent=1 // pred_check
      _
    $region23: #{discriminator_forward.1} parent=1 // pred_check_branch
      %36 = sbr.rel (0) target = $region25
    $region24: #{discriminator_forward.1} parent=1 // pred_region
      _
    $region25: #{discriminator_forward.1} parent=1 // pred_fallthru
      _
    // Predicated region
    $region26: #{discriminator_forward.1} parent=1 // pred_check
      _
    $region27: #{discriminator_forward.1} parent=1 // pred_check_branch
      %38 = sbr.rel (0) target = $region29
    $region28: #{discriminator_forward.1} parent=1 // pred_region
      _
    $region29: #{discriminator_forward.1} parent=1 // pred_fallthru
      _
    // Predicated region
    $region30: #{discriminator_forward.1} parent=1 // pred_check
      _
    $region31: #{discriminator_forward.1} parent=1 // pred_check_branch
      %40 = sbr.rel (0) target = $region33
    $region32: #{discriminator_forward.1} parent=1 // pred_region
      %41 = dma.done [#allocation4], 12544
    $region33: #{discriminator_forward.1} parent=1 // pred_fallthru
      _
    %v43 = vld [vmem:[%s0] sm:$0xff]
    %v44 = vld [vmem:[%s0 + $0x8] sm:$0xff]
    %v45 = vld [vmem:[%s0 + $0x10] sm:$0xff]
    %v46 = vld [vmem:[%s0 + $0x18] sm:$0xf]
    %v47 = vld [vmem:[%s0 + $0x1c] sm:$0xff]
    %v48 = vld [vmem:[%s0 + $0x24] sm:$0xff]
    %v49 = vld [vmem:[%s0 + $0x2c] sm:$0xff]
    %v50 = vld [vmem:[%s0 + $0x34] sm:$0xf]
    %v51 = vld [vmem:[#allocation3] sm:$0xff]
    %v52 = vld [vmem:[#allocation3 + $0x8] sm:$0xff]
    %v53 = vld [vmem:[#allocation3 + $0x10] sm:$0xff]
    %v54 = vld [vmem:[#allocation3 + $0x18] sm:$0xff]
    %v55 = vld [vmem:[#allocation3 + $0x20] sm:$0xff]
    %v56 = vld [vmem:[#allocation3 + $0x28] sm:$0xff]
    %v57 = vld [vmem:[#allocation3 + $0x30] sm:$0xff]
    %v58 = vld [vmem:[#allocation3 + $0x38] sm:$0xff]
    %v59 = vld [vmem:[#allocation3 + $0x40] sm:$0xff]
    %v60 = vld [vmem:[#allocation3 + $0x48] sm:$0xff]
    %v61 = vld [vmem:[#allocation3 + $0x50] sm:$0xff]
    %v62 = vld [vmem:[#allocation3 + $0x58] sm:$0xff]
    %v63 = vld [vmem:[#allocation3 + $0x60] sm:$0xff]
    %v64 = vld [vmem:[#allocation3 + $0x68] sm:$0xff]
    %v65 = vld [vmem:[#allocation3 + $0x70] sm:$0xff]
    %v66 = vld [vmem:[#allocation3 + $0x78] sm:$0xff]
    %v67 = vld [vmem:[#allocation3 + $0x80] sm:$0xff]
    %v68 = vld [vmem:[#allocation3 + $0x88] sm:$0xff]
    %v69 = vld [vmem:[#allocation3 + $0x90] sm:$0xff]
    %v70 = vld [vmem:[#allocation3 + $0x98] sm:$0xff]
    %v71 = vld [vmem:[#allocation3 + $0xa0] sm:$0xff]
    %v72 = vld [vmem:[#allocation3 + $0xa8] sm:$0xff]
    %v73 = vld [vmem:[#allocation3 + $0xb0] sm:$0xff]
    %v74 = vld [vmem:[#allocation3 + $0xb8] sm:$0xff]
    %v75 = vld [vmem:[#allocation3 + $0xc0] sm:$0xff]
    %v76 = vld [vmem:[#allocation3 + $0xc8] sm:$0xff]
    %v77 = vld [vmem:[#allocation3 + $0xd0] sm:$0xff]
    %v78 = vld [vmem:[#allocation3 + $0xd8] sm:$0xff]
    %v79 = vld [vmem:[#allocation3 + $0xe0] sm:$0xff]
    %v80 = vld [vmem:[#allocation3 + $0xe8] sm:$0xff]
    %v81 = vld [vmem:[#allocation3 + $0xf0] sm:$0xff]
    %v82 = vld [vmem:[#allocation3 + $0xf8] sm:$0xff]
    %v83 = vld [vmem:[#allocation3 + $0x100] sm:$0xff]
    %v84 = vld [vmem:[#allocation3 + $0x108] sm:$0xff]
    %v85 = vld [vmem:[#allocation3 + $0x110] sm:$0xff]
    %v86 = vld [vmem:[#allocation3 + $0x118] sm:$0xff]
    %v87 = vld [vmem:[#allocation3 + $0x120] sm:$0xff]
    %v88 = vld [vmem:[#allocation3 + $0x128] sm:$0xff]
    %v89 = vld [vmem:[#allocation3 + $0x130] sm:$0xff]
    %v90 = vld [vmem:[#allocation3 + $0x138] sm:$0xff]
    %v91 = vld [vmem:[#allocation3 + $0x140] sm:$0xff]
    %v92 = vld [vmem:[#allocation3 + $0x148] sm:$0xff]
    %v93 = vld [vmem:[#allocation3 + $0x150] sm:$0xff]
    %v94 = vld [vmem:[#allocation3 + $0x158] sm:$0xff]
    %v95 = vld [vmem:[#allocation3 + $0x160] sm:$0xff]
    %v96 = vld [vmem:[#allocation3 + $0x168] sm:$0xff]
    %v97 = vld [vmem:[#allocation3 + $0x170] sm:$0xff]
    %v98 = vld [vmem:[#allocation3 + $0x178] sm:$0xff]
    %v99 = vld [vmem:[#allocation3 + $0x180] sm:$0xff]
    %v100 = vld [vmem:[#allocation3 + $0x188] sm:$0xff]
    %v101 = vld [vmem:[#allocation3 + $0x190] sm:$0xff]
    %v102 = vld [vmem:[#allocation3 + $0x198] sm:$0xff]
    %v103 = vld [vmem:[#allocation3 + $0x1a0] sm:$0xff]
    %v104 = vld [vmem:[#allocation3 + $0x1a8] sm:$0xff]
    %v105 = vld [vmem:[#allocation3 + $0x1b0] sm:$0xff]
    %v106 = vld [vmem:[#allocation3 + $0x1b8] sm:$0xff]
    %v107 = vld [vmem:[#allocation3 + $0x1c0] sm:$0xff]
    %v108 = vld [vmem:[#allocation3 + $0x1c8] sm:$0xff]
    %v109 = vld [vmem:[#allocation3 + $0x1d0] sm:$0xff]
    %v110 = vld [vmem:[#allocation3 + $0x1d8] sm:$0xff]
    %v111 = vld [vmem:[#allocation3 + $0x1e0] sm:$0xff]
    %v112 = vld [vmem:[#allocation3 + $0x1e8] sm:$0xff]
    %v113 = vld [vmem:[#allocation3 + $0x1f0] sm:$0xff]
    %v114 = vld [vmem:[#allocation3 + $0x1f8] sm:$0xff]
    %v115 = vld [vmem:[#allocation3 + $0x200] sm:$0xff]
    %v116 = vld [vmem:[#allocation3 + $0x208] sm:$0xff]
    %v117 = vld [vmem:[#allocation3 + $0x210] sm:$0xff]
    %v118 = vld [vmem:[#allocation3 + $0x218] sm:$0xff]
    %v119 = vld [vmem:[#allocation3 + $0x220] sm:$0xff]
    %v120 = vld [vmem:[#allocation3 + $0x228] sm:$0xff]
    %v121 = vld [vmem:[#allocation3 + $0x230] sm:$0xff]
    %v122 = vld [vmem:[#allocation3 + $0x238] sm:$0xff]
    %v123 = vld [vmem:[#allocation3 + $0x240] sm:$0xff]
    %v124 = vld [vmem:[#allocation3 + $0x248] sm:$0xff]
    %v125 = vld [vmem:[#allocation3 + $0x250] sm:$0xff]
    %v126 = vld [vmem:[#allocation3 + $0x258] sm:$0xff]
    %v127 = vld [vmem:[#allocation3 + $0x260] sm:$0xff]
    %v128 = vld [vmem:[#allocation3 + $0x268] sm:$0xff]
    %v129 = vld [vmem:[#allocation3 + $0x270] sm:$0xff]
    %v130 = vld [vmem:[#allocation3 + $0x278] sm:$0xff]
    %v131 = vld [vmem:[#allocation3 + $0x280] sm:$0xff]
    %v132 = vld [vmem:[#allocation3 + $0x288] sm:$0xff]
    %v133 = vld [vmem:[#allocation3 + $0x290] sm:$0xff]
    %v134 = vld [vmem:[#allocation3 + $0x298] sm:$0xff]
    %v135 = vld [vmem:[#allocation3 + $0x2a0] sm:$0xff]
    %v136 = vld [vmem:[#allocation3 + $0x2a8] sm:$0xff]
    %v137 = vld [vmem:[#allocation3 + $0x2b0] sm:$0xff]
    %v138 = vld [vmem:[#allocation3 + $0x2b8] sm:$0xff]
    %v139 = vld [vmem:[#allocation3 + $0x2c0] sm:$0xff]
    %v140 = vld [vmem:[#allocation3 + $0x2c8] sm:$0xff]
    %v141 = vld [vmem:[#allocation3 + $0x2d0] sm:$0xff]
    %v142 = vld [vmem:[#allocation3 + $0x2d8] sm:$0xff]
    %v143 = vld [vmem:[#allocation3 + $0x2e0] sm:$0xff]
    %v144 = vld [vmem:[#allocation3 + $0x2e8] sm:$0xff]
    %v145 = vld [vmem:[#allocation3 + $0x2f0] sm:$0xff]
    %v146 = vld [vmem:[#allocation3 + $0x2f8] sm:$0xff]
    %v147 = vld [vmem:[#allocation3 + $0x300] sm:$0xff]
    %v148 = vld [vmem:[#allocation3 + $0x308] sm:$0xff]
    %v149 = vld [vmem:[%s2] sm:$0x3]
    %v151 = vlaneseq
    %v152 = vshrl.u32 %v151, 7
    %v153 = vsub.s32 0, %v152
    %v154 = vrot.slane %v149, %v153
    %v155 = vlaneseq
    %v156 = vshrl.u32 %v155, 7
    %v157 = vsub.s32 1, %v156
    %v158 = vrot.slane %v149, %v157
    %v169 = vunpack.c.l.b16 %v43
    %v170 = vunpack.c.h.b16 %v43
    %v171 = vunpack.c.l.b16 %v44
    %v172 = vunpack.c.h.b16 %v44
    %v173 = vunpack.c.l.b16 %v45
    %v174 = vunpack.c.h.b16 %v45
    %v175 = vunpack.c.l.b16 %v46
    %v176 = vunpack.c.l.b16 %v47
    %v177 = vunpack.c.h.b16 %v47
    %v178 = vunpack.c.l.b16 %v48
    %v179 = vunpack.c.h.b16 %v48
    %v180 = vunpack.c.l.b16 %v49
    %v181 = vunpack.c.h.b16 %v49
    %v182 = vunpack.c.l.b16 %v50
    %v183 = vpack.c.b16 %v176, %v169
    %v184 = vpack.c.b16 %v177, %v170
    %v185 = vpack.c.b16 %v178, %v171
    %v186 = vpack.c.b16 %v179, %v172
    %v187 = vpack.c.b16 %v180, %v173
    %v188 = vpack.c.b16 %v181, %v174
    %v189 = vpack.c.b16 %v182, %v175
    %v294 = vunpack.c.l.b16 %v51
    %v295 = vunpack.c.h.b16 %v51
    %v296 = vunpack.c.l.b16 %v52
    %v297 = vunpack.c.h.b16 %v52
    %v298 = vunpack.c.l.b16 %v53
    %v299 = vunpack.c.h.b16 %v53
    %v300 = vunpack.c.l.b16 %v54
    %v301 = vunpack.c.h.b16 %v54
    %v302 = vunpack.c.l.b16 %v55
    %v303 = vunpack.c.h.b16 %v55
    %v304 = vunpack.c.l.b16 %v56
    %v305 = vunpack.c.h.b16 %v56
    %v306 = vunpack.c.l.b16 %v57
    %v307 = vunpack.c.h.b16 %v57
    %v308 = vunpack.c.l.b16 %v58
    %v309 = vunpack.c.h.b16 %v58
    %v310 = vunpack.c.l.b16 %v59
    %v311 = vunpack.c.h.b16 %v59
    %v312 = vunpack.c.l.b16 %v60
    %v313 = vunpack.c.h.b16 %v60
    %v314 = vunpack.c.l.b16 %v61
    %v315 = vunpack.c.h.b16 %v61
    %v316 = vunpack.c.l.b16 %v62
    %v317 = vunpack.c.h.b16 %v62
    %v318 = vunpack.c.l.b16 %v63
    %v319 = vunpack.c.h.b16 %v63
    %v320 = vunpack.c.l.b16 %v64
    %v321 = vunpack.c.h.b16 %v64
    %v322 = vunpack.c.l.b16 %v65
    %v323 = vunpack.c.h.b16 %v65
    %v324 = vunpack.c.l.b16 %v66
    %v325 = vunpack.c.h.b16 %v66
    %v326 = vunpack.c.l.b16 %v67
    %v327 = vunpack.c.h.b16 %v67
    %v328 = vunpack.c.l.b16 %v68
    %v329 = vunpack.c.h.b16 %v68
    %v330 = vunpack.c.l.b16 %v69
    %v331 = vunpack.c.h.b16 %v69
    %v332 = vunpack.c.l.b16 %v70
    %v333 = vunpack.c.h.b16 %v70
    %v334 = vunpack.c.l.b16 %v71
    %v335 = vunpack.c.h.b16 %v71
    %v336 = vunpack.c.l.b16 %v72
    %v337 = vunpack.c.h.b16 %v72
    %v338 = vunpack.c.l.b16 %v73
    %v339 = vunpack.c.h.b16 %v73
    %v340 = vunpack.c.l.b16 %v74
    %v341 = vunpack.c.h.b16 %v74
    %v342 = vunpack.c.l.b16 %v75
    %v343 = vunpack.c.h.b16 %v75
    %v344 = vunpack.c.l.b16 %v76
    %v345 = vunpack.c.h.b16 %v76
    %v346 = vunpack.c.l.b16 %v77
    %v347 = vunpack.c.h.b16 %v77
    %v348 = vunpack.c.l.b16 %v78
    %v349 = vunpack.c.h.b16 %v78
    %v350 = vunpack.c.l.b16 %v79
    %v351 = vunpack.c.h.b16 %v79
    %v352 = vunpack.c.l.b16 %v80
    %v353 = vunpack.c.h.b16 %v80
    %v354 = vunpack.c.l.b16 %v81
    %v355 = vunpack.c.h.b16 %v81
    %v356 = vunpack.c.l.b16 %v82
    %v357 = vunpack.c.h.b16 %v82
    %v358 = vunpack.c.l.b16 %v83
    %v359 = vunpack.c.h.b16 %v83
    %v360 = vunpack.c.l.b16 %v84
    %v361 = vunpack.c.h.b16 %v84
    %v362 = vunpack.c.l.b16 %v85
    %v363 = vunpack.c.h.b16 %v85
    %v364 = vunpack.c.l.b16 %v86
    %v365 = vunpack.c.h.b16 %v86
    %v366 = vunpack.c.l.b16 %v87
    %v367 = vunpack.c.h.b16 %v87
    %v368 = vunpack.c.l.b16 %v88
    %v369 = vunpack.c.h.b16 %v88
    %v370 = vunpack.c.l.b16 %v89
    %v371 = vunpack.c.h.b16 %v89
    %v372 = vunpack.c.l.b16 %v90
    %v373 = vunpack.c.h.b16 %v90
    %v374 = vunpack.c.l.b16 %v91
    %v375 = vunpack.c.h.b16 %v91
    %v376 = vunpack.c.l.b16 %v92
    %v377 = vunpack.c.h.b16 %v92
    %v378 = vunpack.c.l.b16 %v93
    %v379 = vunpack.c.h.b16 %v93
    %v380 = vunpack.c.l.b16 %v94
    %v381 = vunpack.c.h.b16 %v94
    %v382 = vunpack.c.l.b16 %v95
    %v383 = vunpack.c.h.b16 %v95
    %v384 = vunpack.c.l.b16 %v96
    %v385 = vunpack.c.h.b16 %v96
    %v386 = vunpack.c.l.b16 %v97
    %v387 = vunpack.c.h.b16 %v97
    %v388 = vunpack.c.l.b16 %v98
    %v389 = vunpack.c.h.b16 %v98
    %v390 = vunpack.c.l.b16 %v99
    %v391 = vunpack.c.h.b16 %v99
    %v392 = vunpack.c.l.b16 %v100
    %v393 = vunpack.c.h.b16 %v100
    %v394 = vunpack.c.l.b16 %v101
    %v395 = vunpack.c.h.b16 %v101
    %v396 = vunpack.c.l.b16 %v102
    %v397 = vunpack.c.h.b16 %v102
    %v398 = vunpack.c.l.b16 %v103
    %v399 = vunpack.c.h.b16 %v103
    %v400 = vunpack.c.l.b16 %v104
    %v401 = vunpack.c.h.b16 %v104
    %v402 = vunpack.c.l.b16 %v105
    %v403 = vunpack.c.h.b16 %v105
    %v404 = vunpack.c.l.b16 %v106
    %v405 = vunpack.c.h.b16 %v106
    %v406 = vunpack.c.l.b16 %v107
    %v407 = vunpack.c.h.b16 %v107
    %v408 = vunpack.c.l.b16 %v108
    %v409 = vunpack.c.h.b16 %v108
    %v410 = vunpack.c.l.b16 %v109
    %v411 = vunpack.c.h.b16 %v109
    %v412 = vunpack.c.l.b16 %v110
    %v413 = vunpack.c.h.b16 %v110
    %v414 = vunpack.c.l.b16 %v111
    %v415 = vunpack.c.h.b16 %v111
    %v416 = vunpack.c.l.b16 %v112
    %v417 = vunpack.c.h.b16 %v112
    %v418 = vunpack.c.l.b16 %v113
    %v419 = vunpack.c.h.b16 %v113
    %v420 = vunpack.c.l.b16 %v114
    %v421 = vunpack.c.h.b16 %v114
    %v422 = vunpack.c.l.b16 %v115
    %v423 = vunpack.c.h.b16 %v115
    %v424 = vunpack.c.l.b16 %v116
    %v425 = vunpack.c.h.b16 %v116
    %v426 = vunpack.c.l.b16 %v117
    %v427 = vunpack.c.h.b16 %v117
    %v428 = vunpack.c.l.b16 %v118
    %v429 = vunpack.c.h.b16 %v118
    %v430 = vunpack.c.l.b16 %v119
    %v431 = vunpack.c.h.b16 %v119
    %v432 = vunpack.c.l.b16 %v120
    %v433 = vunpack.c.h.b16 %v120
    %v434 = vunpack.c.l.b16 %v121
    %v435 = vunpack.c.h.b16 %v121
    %v436 = vunpack.c.l.b16 %v122
    %v437 = vunpack.c.h.b16 %v122
    %v438 = vunpack.c.l.b16 %v123
    %v439 = vunpack.c.h.b16 %v123
    %v440 = vunpack.c.l.b16 %v124
    %v441 = vunpack.c.h.b16 %v124
    %v442 = vunpack.c.l.b16 %v125
    %v443 = vunpack.c.h.b16 %v125
    %v444 = vunpack.c.l.b16 %v126
    %v445 = vunpack.c.h.b16 %v126
    %v446 = vunpack.c.l.b16 %v127
    %v447 = vunpack.c.h.b16 %v127
    %v448 = vunpack.c.l.b16 %v128
    %v449 = vunpack.c.h.b16 %v128
    %v450 = vunpack.c.l.b16 %v129
    %v451 = vunpack.c.h.b16 %v129
    %v452 = vunpack.c.l.b16 %v130
    %v453 = vunpack.c.h.b16 %v130
    %v454 = vunpack.c.l.b16 %v131
    %v455 = vunpack.c.h.b16 %v131
    %v456 = vunpack.c.l.b16 %v132
    %v457 = vunpack.c.h.b16 %v132
    %v458 = vunpack.c.l.b16 %v133
    %v459 = vunpack.c.h.b16 %v133
    %v460 = vunpack.c.l.b16 %v134
    %v461 = vunpack.c.h.b16 %v134
    %v462 = vunpack.c.l.b16 %v135
    %v463 = vunpack.c.h.b16 %v135
    %v464 = vunpack.c.l.b16 %v136
    %v465 = vunpack.c.h.b16 %v136
    %v466 = vunpack.c.l.b16 %v137
    %v467 = vunpack.c.h.b16 %v137
    %v468 = vunpack.c.l.b16 %v138
    %v469 = vunpack.c.h.b16 %v138
    %v470 = vunpack.c.l.b16 %v139
    %v471 = vunpack.c.h.b16 %v139
    %v472 = vunpack.c.l.b16 %v140
    %v473 = vunpack.c.h.b16 %v140
    %v474 = vunpack.c.l.b16 %v141
    %v475 = vunpack.c.h.b16 %v141
    %v476 = vunpack.c.l.b16 %v142
    %v477 = vunpack.c.h.b16 %v142
    %v478 = vunpack.c.l.b16 %v143
    %v479 = vunpack.c.h.b16 %v143
    %v480 = vunpack.c.l.b16 %v144
    %v481 = vunpack.c.h.b16 %v144
    %v482 = vunpack.c.l.b16 %v145
    %v483 = vunpack.c.h.b16 %v145
    %v484 = vunpack.c.l.b16 %v146
    %v485 = vunpack.c.h.b16 %v146
    %v486 = vunpack.c.l.b16 %v147
    %v487 = vunpack.c.h.b16 %v147
    %v488 = vunpack.c.l.b16 %v148
    %v489 = vunpack.c.h.b16 %v148
    %v490 = vpack.c.b16 %v296, %v294
    %v491 = vpack.c.b16 %v297, %v295
    %v492 = vpack.c.b16 %v300, %v298
    %v493 = vpack.c.b16 %v301, %v299
    %v494 = vpack.c.b16 %v304, %v302
    %v495 = vpack.c.b16 %v305, %v303
    %v496 = vpack.c.b16 %v308, %v306
    %v497 = vpack.c.b16 %v309, %v307
    %v498 = vpack.c.b16 %v312, %v310
    %v499 = vpack.c.b16 %v313, %v311
    %v500 = vpack.c.b16 %v316, %v314
    %v501 = vpack.c.b16 %v317, %v315
    %v502 = vpack.c.b16 %v320, %v318
    %v503 = vpack.c.b16 %v321, %v319
    %v504 = vpack.c.b16 %v324, %v322
    %v505 = vpack.c.b16 %v325, %v323
    %v506 = vpack.c.b16 %v328, %v326
    %v507 = vpack.c.b16 %v329, %v327
    %v508 = vpack.c.b16 %v332, %v330
    %v509 = vpack.c.b16 %v333, %v331
    %v510 = vpack.c.b16 %v336, %v334
    %v511 = vpack.c.b16 %v337, %v335
    %v512 = vpack.c.b16 %v340, %v338
    %v513 = vpack.c.b16 %v341, %v339
    %v514 = vpack.c.b16 %v344, %v342
    %v515 = vpack.c.b16 %v345, %v343
    %v516 = vpack.c.b16 %v348, %v346
    %v517 = vpack.c.b16 %v349, %v347
    %v518 = vpack.c.b16 %v352, %v350
    %v519 = vpack.c.b16 %v353, %v351
    %v520 = vpack.c.b16 %v356, %v354
    %v521 = vpack.c.b16 %v357, %v355
    %v522 = vpack.c.b16 %v360, %v358
    %v523 = vpack.c.b16 %v361, %v359
    %v524 = vpack.c.b16 %v364, %v362
    %v525 = vpack.c.b16 %v365, %v363
    %v526 = vpack.c.b16 %v368, %v366
    %v527 = vpack.c.b16 %v369, %v367
    %v528 = vpack.c.b16 %v372, %v370
    %v529 = vpack.c.b16 %v373, %v371
    %v530 = vpack.c.b16 %v376, %v374
    %v531 = vpack.c.b16 %v377, %v375
    %v532 = vpack.c.b16 %v380, %v378
    %v533 = vpack.c.b16 %v381, %v379
    %v534 = vpack.c.b16 %v384, %v382
    %v535 = vpack.c.b16 %v385, %v383
    %v536 = vpack.c.b16 %v388, %v386
    %v537 = vpack.c.b16 %v389, %v387
    %v538 = vpack.c.b16 %v392, %v390
    %v539 = vpack.c.b16 %v393, %v391
    %v540 = vpack.c.b16 %v396, %v394
    %v541 = vpack.c.b16 %v397, %v395
    %v542 = vpack.c.b16 %v400, %v398
    %v543 = vpack.c.b16 %v401, %v399
    %v544 = vpack.c.b16 %v404, %v402
    %v545 = vpack.c.b16 %v405, %v403
    %v546 = vpack.c.b16 %v408, %v406
    %v547 = vpack.c.b16 %v409, %v407
    %v548 = vpack.c.b16 %v412, %v410
    %v549 = vpack.c.b16 %v413, %v411
    %v550 = vpack.c.b16 %v416, %v414
    %v551 = vpack.c.b16 %v417, %v415
    %v552 = vpack.c.b16 %v420, %v418
    %v553 = vpack.c.b16 %v421, %v419
    %v554 = vpack.c.b16 %v424, %v422
    %v555 = vpack.c.b16 %v425, %v423
    %v556 = vpack.c.b16 %v428, %v426
    %v557 = vpack.c.b16 %v429, %v427
    %v558 = vpack.c.b16 %v432, %v430
    %v559 = vpack.c.b16 %v433, %v431
    %v560 = vpack.c.b16 %v436, %v434
    %v561 = vpack.c.b16 %v437, %v435
    %v562 = vpack.c.b16 %v440, %v438
    %v563 = vpack.c.b16 %v441, %v439
    %v564 = vpack.c.b16 %v444, %v442
    %v565 = vpack.c.b16 %v445, %v443
    %v566 = vpack.c.b16 %v448, %v446
    %v567 = vpack.c.b16 %v449, %v447
    %v568 = vpack.c.b16 %v452, %v450
    %v569 = vpack.c.b16 %v453, %v451
    %v570 = vpack.c.b16 %v456, %v454
    %v571 = vpack.c.b16 %v457, %v455
    %v572 = vpack.c.b16 %v460, %v458
    %v573 = vpack.c.b16 %v461, %v459
    %v574 = vpack.c.b16 %v464, %v462
    %v575 = vpack.c.b16 %v465, %v463
    %v576 = vpack.c.b16 %v468, %v466
    %v577 = vpack.c.b16 %v469, %v467
    %v578 = vpack.c.b16 %v472, %v470
    %v579 = vpack.c.b16 %v473, %v471
    %v580 = vpack.c.b16 %v476, %v474
    %v581 = vpack.c.b16 %v477, %v475
    %v582 = vpack.c.b16 %v480, %v478
    %v583 = vpack.c.b16 %v481, %v479
    %v584 = vpack.c.b16 %v484, %v482
    %v585 = vpack.c.b16 %v485, %v483
    %v586 = vpack.c.b16 %v488, %v486
    %v587 = vpack.c.b16 %v489, %v487
    %vm686 = vcmask 130048
    %v688 = vsel %vm686, %v189, 0
    %690 = vmatprep.subr.bf16.mxu0 %v491
    %691 = vmatpush1.bf16.msra.mxu0 %v490
    %692 = vmatprep.subr.bf16.mxu0 %v493
    %693 = vmatpush1.bf16.msra.mxu0 %v492
    %694 = vmatprep.subr.bf16.mxu0 %v495
    %695 = vmatpush1.bf16.msra.mxu0 %v494
    %696 = vmatprep.subr.bf16.mxu0 %v497
    %697 = vmatpush1.bf16.msra.mxu0 %v496
    %698 = vmatprep.subr.bf16.mxu0 %v499
    %699 = vmatpush1.bf16.msra.mxu0 %v498
    %700 = vmatprep.subr.bf16.mxu0 %v501
    %701 = vmatpush1.bf16.msra.mxu0 %v500
    %702 = vmatprep.subr.bf16.mxu0 %v503
    %703 = vmatpush1.bf16.msra.mxu0 %v502
    %704 = vmatprep.subr.bf16.mxu0 %v505
    %705 = vmatpush1.bf16.msra.mxu0 %v504
    %706 = vmatprep.subr.bf16.mxu0 %v507
    %707 = vmatpush1.bf16.msra.mxu0 %v506
    %708 = vmatprep.subr.bf16.mxu0 %v509
    %709 = vmatpush1.bf16.msra.mxu0 %v508
    %710 = vmatprep.subr.bf16.mxu0 %v511
    %711 = vmatpush1.bf16.msra.mxu0 %v510
    %712 = vmatprep.subr.bf16.mxu0 %v513
    %713 = vmatpush1.bf16.msra.mxu0 %v512
    %714 = vmatprep.subr.bf16.mxu0 %v515
    %715 = vmatpush1.bf16.msra.mxu0 %v514
    %716 = vmatprep.subr.bf16.mxu0 %v517
    %717 = vmatpush1.bf16.msra.mxu0 %v516
    %718 = vmatprep.subr.bf16.mxu0 %v519
    %719 = vmatpush1.bf16.msra.mxu0 %v518
    %720 = vmatprep.subr.bf16.mxu0 %v521
    %721 = vmatpush1.bf16.msra.mxu0 %v520
    %722 = vmatprep.mubr.bf16.mxu0 %v184
    %723 = vmatmul.mubr.bf16.gmra.mrb[0].mxu0 %v183
    %v724 = vpop.f32.mrb[0].mxu0
    %v725 = vadd.f32 %v154, %v724
    %v726 = vpop.f32.mrb[0].mxu0
    %v727 = vadd.f32 %v158, %v726
    %v728 = vpop.f32.mrb[0].mxu0
    %v729 = vadd.f32 %v154, %v728
    %v730 = vpop.f32.mrb[0].mxu0
    %v731 = vadd.f32 %v158, %v730
    %732 = vdwg.mxu0
    %733 = vmatprep.subr.bf16.mxu0 %v523
    %734 = vmatpush1.bf16.msra.mxu0 %v522
    %735 = vmatprep.subr.bf16.mxu0 %v525
    %736 = vmatpush1.bf16.msra.mxu0 %v524
    %737 = vmatprep.subr.bf16.mxu0 %v527
    %738 = vmatpush1.bf16.msra.mxu0 %v526
    %739 = vmatprep.subr.bf16.mxu0 %v529
    %740 = vmatpush1.bf16.msra.mxu0 %v528
    %741 = vmatprep.subr.bf16.mxu0 %v531
    %742 = vmatpush1.bf16.msra.mxu0 %v530
    %743 = vmatprep.subr.bf16.mxu0 %v533
    %744 = vmatpush1.bf16.msra.mxu0 %v532
    %745 = vmatprep.subr.bf16.mxu0 %v535
    %746 = vmatpush1.bf16.msra.mxu0 %v534
    %747 = vmatprep.subr.bf16.mxu0 %v537
    %748 = vmatpush1.bf16.msra.mxu0 %v536
    %749 = vmatprep.subr.bf16.mxu0 %v539
    %750 = vmatpush1.bf16.msra.mxu0 %v538
    %751 = vmatprep.subr.bf16.mxu0 %v541
    %752 = vmatpush1.bf16.msra.mxu0 %v540
    %753 = vmatprep.subr.bf16.mxu0 %v543
    %754 = vmatpush1.bf16.msra.mxu0 %v542
    %755 = vmatprep.subr.bf16.mxu0 %v545
    %756 = vmatpush1.bf16.msra.mxu0 %v544
    %757 = vmatprep.subr.bf16.mxu0 %v547
    %758 = vmatpush1.bf16.msra.mxu0 %v546
    %759 = vmatprep.subr.bf16.mxu0 %v549
    %760 = vmatpush1.bf16.msra.mxu0 %v548
    %761 = vmatprep.subr.bf16.mxu0 %v551
    %762 = vmatpush1.bf16.msra.mxu0 %v550
    %763 = vmatprep.subr.bf16.mxu0 %v553
    %764 = vmatpush1.bf16.msra.mxu0 %v552
    %765 = vmatprep.mubr.bf16.mxu0 %v186
    %766 = vmatmul.mubr.bf16.gmra.mrb[0].mxu0 %v185
    %v767 = vpop.f32.mrb[0].mxu0
    %v768 = vadd.f32 %v725, %v767
    %v769 = vpop.f32.mrb[0].mxu0
    %v770 = vadd.f32 %v727, %v769
    %v771 = vpop.f32.mrb[0].mxu0
    %v772 = vadd.f32 %v729, %v771
    %v773 = vpop.f32.mrb[0].mxu0
    %v774 = vadd.f32 %v731, %v773
    %775 = vdwg.mxu0
    %776 = vmatprep.subr.bf16.mxu0 %v555
    %777 = vmatpush1.bf16.msra.mxu0 %v554
    %778 = vmatprep.subr.bf16.mxu0 %v557
    %779 = vmatpush1.bf16.msra.mxu0 %v556
    %780 = vmatprep.subr.bf16.mxu0 %v559
    %781 = vmatpush1.bf16.msra.mxu0 %v558
    %782 = vmatprep.subr.bf16.mxu0 %v561
    %783 = vmatpush1.bf16.msra.mxu0 %v560
    %784 = vmatprep.subr.bf16.mxu0 %v563
    %785 = vmatpush1.bf16.msra.mxu0 %v562
    %786 = vmatprep.subr.bf16.mxu0 %v565
    %787 = vmatpush1.bf16.msra.mxu0 %v564
    %788 = vmatprep.subr.bf16.mxu0 %v567
    %789 = vmatpush1.bf16.msra.mxu0 %v566
    %790 = vmatprep.subr.bf16.mxu0 %v569
    %791 = vmatpush1.bf16.msra.mxu0 %v568
    %792 = vmatprep.subr.bf16.mxu0 %v571
    %793 = vmatpush1.bf16.msra.mxu0 %v570
    %794 = vmatprep.subr.bf16.mxu0 %v573
    %795 = vmatpush1.bf16.msra.mxu0 %v572
    %796 = vmatprep.subr.bf16.mxu0 %v575
    %797 = vmatpush1.bf16.msra.mxu0 %v574
    %798 = vmatprep.subr.bf16.mxu0 %v577
    %799 = vmatpush1.bf16.msra.mxu0 %v576
    %800 = vmatprep.subr.bf16.mxu0 %v579
    %801 = vmatpush1.bf16.msra.mxu0 %v578
    %802 = vmatprep.subr.bf16.mxu0 %v581
    %803 = vmatpush1.bf16.msra.mxu0 %v580
    %804 = vmatprep.subr.bf16.mxu0 %v583
    %805 = vmatpush1.bf16.msra.mxu0 %v582
    %806 = vmatprep.subr.bf16.mxu0 %v585
    %807 = vmatpush1.bf16.msra.mxu0 %v584
    %808 = vmatprep.mubr.bf16.mxu0 %v188
    %809 = vmatmul.mubr.bf16.gmra.mrb[0].mxu0 %v187
    %v810 = vpop.f32.mrb[0].mxu0
    %v811 = vadd.f32 %v768, %v810
    %v812 = vpop.f32.mrb[0].mxu0
    %v813 = vadd.f32 %v770, %v812
    %v814 = vpop.f32.mrb[0].mxu0
    %v815 = vadd.f32 %v772, %v814
    %v816 = vpop.f32.mrb[0].mxu0
    %v817 = vadd.f32 %v774, %v816
    %818 = vdwg.mxu0
    %819 = vmatprep.subr.bf16.mxu0 %v587
    %820 = vmatpush1.bf16.msra.mxu0 %v586
    %821 = vmatprep.subr.bf16.mxu0 0
    %822 = vmatpush1.bf16.msra.mxu0 0
    %823 = vmatprep.subr.bf16.mxu0 0
    %824 = vmatpush1.bf16.msra.mxu0 0
    %825 = vmatprep.subr.bf16.mxu0 0
    %826 = vmatpush1.bf16.msra.mxu0 0
    %827 = vmatprep.subr.bf16.mxu0 0
    %828 = vmatpush1.bf16.msra.mxu0 0
    %829 = vmatprep.subr.bf16.mxu0 0
    %830 = vmatpush1.bf16.msra.mxu0 0
    %831 = vmatprep.subr.bf16.mxu0 0
    %832 = vmatpush1.bf16.msra.mxu0 0
    %833 = vmatprep.subr.bf16.mxu0 0
    %834 = vmatpush1.bf16.msra.mxu0 0
    %835 = vmatprep.subr.bf16.mxu0 0
    %836 = vmatpush1.bf16.msra.mxu0 0
    %837 = vmatprep.subr.bf16.mxu0 0
    %838 = vmatpush1.bf16.msra.mxu0 0
    %839 = vmatprep.subr.bf16.mxu0 0
    %840 = vmatpush1.bf16.msra.mxu0 0
    %841 = vmatprep.subr.bf16.mxu0 0
    %842 = vmatpush1.bf16.msra.mxu0 0
    %843 = vmatprep.subr.bf16.mxu0 0
    %844 = vmatpush1.bf16.msra.mxu0 0
    %845 = vmatprep.subr.bf16.mxu0 0
    %846 = vmatpush1.bf16.msra.mxu0 0
    %847 = vmatprep.subr.bf16.mxu0 0
    %848 = vmatpush1.bf16.msra.mxu0 0
    %849 = vmatprep.subr.bf16.mxu0 0
    %850 = vmatpush1.bf16.msra.mxu0 0
    %851 = vmatprep.mubr.bf16.mxu0 0
    %852 = vmatmul.mubr.bf16.gmra.mrb[0].mxu0 %v688
    %v853 = vpop.f32.mrb[0].mxu0
    %v854 = vadd.f32 %v811, %v853
    %v855 = vpop.f32.mrb[0].mxu0
    %v856 = vadd.f32 %v813, %v855
    %v857 = vpop.f32.mrb[0].mxu0
    %v858 = vadd.f32 %v815, %v857
    %v859 = vpop.f32.mrb[0].mxu0
    %v860 = vadd.f32 %v817, %v859
    %861 = vdwg.mxu0
    %v862 = vmul.f32 %v854, 0.2
    %v863 = vmul.f32 %v856, 0.2
    %v864 = vmul.f32 %v858, 0.2
    %v865 = vmul.f32 %v860, 0.2
    %v866 = vmax.f32 %v854, %v862
    %v867 = vmax.f32 %v856, %v863
    %v868 = vmax.f32 %v858, %v864
    %v869 = vmax.f32 %v860, %v865
    %v870 = vpack.c.bf16 %v868, %v866
    %v871 = vpack.c.bf16 %v869, %v867
    %v872 = vld [vmem:[%s3] sm:$0xf]
    %v873 = vld [vmem:[%s3 + $0x4] sm:$0xf]
    %v874 = vld [vmem:[%s3 + $0x8] sm:$0xf]
    %v875 = vld [vmem:[%s3 + $0xc] sm:$0xf]
    %v876 = vld [vmem:[%s3 + $0x10] sm:$0xf]
    %v877 = vld [vmem:[%s3 + $0x14] sm:$0xf]
    %v878 = vld [vmem:[%s3 + $0x18] sm:$0xf]
    %v879 = vld [vmem:[%s3 + $0x1c] sm:$0xf]
    %v880 = vld [vmem:[%s3 + $0x20] sm:$0xf]
    %v881 = vld [vmem:[%s3 + $0x24] sm:$0xf]
    %v882 = vld [vmem:[%s3 + $0x28] sm:$0xf]
    %v883 = vld [vmem:[%s3 + $0x2c] sm:$0xf]
    %v884 = vld [vmem:[%s3 + $0x30] sm:$0xf]
    %v885 = vld [vmem:[%s3 + $0x34] sm:$0xf]
    %v886 = vld [vmem:[%s3 + $0x38] sm:$0xf]
    %v887 = vld [vmem:[%s3 + $0x3c] sm:$0xf]
    %v888 = vld [vmem:[%s3 + $0x40] sm:$0xf]
    %v889 = vld [vmem:[%s3 + $0x44] sm:$0xf]
    %v890 = vld [vmem:[%s3 + $0x48] sm:$0xf]
    %v891 = vld [vmem:[%s3 + $0x4c] sm:$0xf]
    %v892 = vld [vmem:[%s3 + $0x50] sm:$0xf]
    %v893 = vld [vmem:[%s3 + $0x54] sm:$0xf]
    %v894 = vld [vmem:[%s3 + $0x58] sm:$0xf]
    %v895 = vld [vmem:[%s3 + $0x5c] sm:$0xf]
    %v896 = vld [vmem:[%s3 + $0x60] sm:$0xf]
    %v897 = vld [vmem:[%s3 + $0x64] sm:$0xf]
    %v898 = vld [vmem:[%s3 + $0x68] sm:$0xf]
    %v899 = vld [vmem:[%s3 + $0x6c] sm:$0xf]
    %v900 = vld [vmem:[%s3 + $0x70] sm:$0xf]
    %v901 = vld [vmem:[%s3 + $0x74] sm:$0xf]
    %v902 = vld [vmem:[%s3 + $0x78] sm:$0xf]
    %v903 = vld [vmem:[%s3 + $0x7c] sm:$0xf]
    %v904 = vld [vmem:[%s4] sm:$0x1]
    %v906 = vlaneseq
    %v907 = vshrl.u32 %v906, 7
    %v908 = vsub.s32 0, %v907
    %v909 = vrot.slane %v904, %v908
    %v943 = vunpack.c.l.b16 %v872
    %v944 = vunpack.c.l.b16 %v873
    %v945 = vunpack.c.l.b16 %v874
    %v946 = vunpack.c.l.b16 %v875
    %v947 = vunpack.c.l.b16 %v876
    %v948 = vunpack.c.l.b16 %v877
    %v949 = vunpack.c.l.b16 %v878
    %v950 = vunpack.c.l.b16 %v879
    %v951 = vunpack.c.l.b16 %v880
    %v952 = vunpack.c.l.b16 %v881
    %v953 = vunpack.c.l.b16 %v882
    %v954 = vunpack.c.l.b16 %v883
    %v955 = vunpack.c.l.b16 %v884
    %v956 = vunpack.c.l.b16 %v885
    %v957 = vunpack.c.l.b16 %v886
    %v958 = vunpack.c.l.b16 %v887
    %v959 = vunpack.c.l.b16 %v888
    %v960 = vunpack.c.l.b16 %v889
    %v961 = vunpack.c.l.b16 %v890
    %v962 = vunpack.c.l.b16 %v891
    %v963 = vunpack.c.l.b16 %v892
    %v964 = vunpack.c.l.b16 %v893
    %v965 = vunpack.c.l.b16 %v894
    %v966 = vunpack.c.l.b16 %v895
    %v967 = vunpack.c.l.b16 %v896
    %v968 = vunpack.c.l.b16 %v897
    %v969 = vunpack.c.l.b16 %v898
    %v970 = vunpack.c.l.b16 %v899
    %v971 = vunpack.c.l.b16 %v900
    %v972 = vunpack.c.l.b16 %v901
    %v973 = vunpack.c.l.b16 %v902
    %v974 = vunpack.c.l.b16 %v903
    %v975 = vpack.c.b16 %v944, %v943
    %v976 = vpack.c.b16 %v946, %v945
    %v977 = vpack.c.b16 %v948, %v947
    %v978 = vpack.c.b16 %v950, %v949
    %v979 = vpack.c.b16 %v952, %v951
    %v980 = vpack.c.b16 %v954, %v953
    %v981 = vpack.c.b16 %v956, %v955
    %v982 = vpack.c.b16 %v958, %v957
    %v983 = vpack.c.b16 %v960, %v959
    %v984 = vpack.c.b16 %v962, %v961
    %v985 = vpack.c.b16 %v964, %v963
    %v986 = vpack.c.b16 %v966, %v965
    %v987 = vpack.c.b16 %v968, %v967
    %v988 = vpack.c.b16 %v970, %v969
    %v989 = vpack.c.b16 %v972, %v971
    %v990 = vpack.c.b16 %v974, %v973
    %1007 = vmatprep.subr.bf16.mxu0 0
    %1008 = vmatpush1.bf16.msra.mxu0 %v975
    %1009 = vmatprep.subr.bf16.mxu0 0
    %1010 = vmatpush1.bf16.msra.mxu0 %v976
    %1011 = vmatprep.subr.bf16.mxu0 0
    %1012 = vmatpush1.bf16.msra.mxu0 %v977
    %1013 = vmatprep.subr.bf16.mxu0 0
    %1014 = vmatpush1.bf16.msra.mxu0 %v978
    %1015 = vmatprep.subr.bf16.mxu0 0
    %1016 = vmatpush1.bf16.msra.mxu0 %v979
    %1017 = vmatprep.subr.bf16.mxu0 0
    %1018 = vmatpush1.bf16.msra.mxu0 %v980
    %1019 = vmatprep.subr.bf16.mxu0 0
    %1020 = vmatpush1.bf16.msra.mxu0 %v981
    %1021 = vmatprep.subr.bf16.mxu0 0
    %1022 = vmatpush1.bf16.msra.mxu0 %v982
    %1023 = vmatprep.subr.bf16.mxu0 0
    %1024 = vmatpush1.bf16.msra.mxu0 %v983
    %1025 = vmatprep.subr.bf16.mxu0 0
    %1026 = vmatpush1.bf16.msra.mxu0 %v984
    %1027 = vmatprep.subr.bf16.mxu0 0
    %1028 = vmatpush1.bf16.msra.mxu0 %v985
    %1029 = vmatprep.subr.bf16.mxu0 0
    %1030 = vmatpush1.bf16.msra.mxu0 %v986
    %1031 = vmatprep.subr.bf16.mxu0 0
    %1032 = vmatpush1.bf16.msra.mxu0 %v987
    %1033 = vmatprep.subr.bf16.mxu0 0
    %1034 = vmatpush1.bf16.msra.mxu0 %v988
    %1035 = vmatprep.subr.bf16.mxu0 0
    %1036 = vmatpush1.bf16.msra.mxu0 %v989
    %1037 = vmatprep.subr.bf16.mxu0 0
    %1038 = vmatpush1.bf16.msra.mxu0 %v990
    %1039 = vmatprep.mubr.bf16.mxu0 %v871
    %1040 = vmatmul.mubr.bf16.gmra.mrb[0].mxu0 %v870
    %v1041 = vpop.f32.mrb[0].mxu0
    %v1042 = vadd.f32 %v909, %v1041
    %v1043 = vpop.f32.mrb[0].mxu0
    %v1044 = vpop.f32.mrb[0].mxu0
    %v1045 = vadd.f32 %v909, %v1044
    %v1046 = vpop.f32.mrb[0].mxu0
    %1047 = vdwg.mxu0
    %v1048 = vmul.f32 %v1042, 0.2
    %v1049 = vmul.f32 %v1045, 0.2
    %v1050 = vmax.f32 %v1042, %v1048
    %v1051 = vmax.f32 %v1045, %v1049
    %v1052 = vld [vmem:[%s5] sm:$0x1]
    %v1054 = vlaneseq
    %v1055 = vshrl.u32 %v1054, 7
    %v1056 = vsub.s32 0, %v1055
    %v1057 = vrot.slane %v1052, %v1056
    %v1059 = vmul.f32 %v1050, %v1057
    %v1060 = vmul.f32 %v1051, %v1057
    %1061 = vadd.xlane.f32.xlu0 %v1059
    %v1062 = vpop.xlane.xlu0 %1061
    %1063 = vadd.xlane.f32.xlu0 %v1060
    %v1064 = vpop.xlane.xlu0 %1063
    %v1065 = vld [vmem:[#allocation2] sm:$0x1]
    %v1067 = vlaneseq
    %v1068 = vshrl.u32 %v1067, 7
    %v1069 = vsub.s32 0, %v1068
    %v1070 = vrot.slane %v1065, %v1069
    %v1072 = vadd.f32 %v1062, %v1070
    %v1073 = vadd.f32 %v1064, %v1070
    %v1074 = vxor.u32 %v1072, 2147483648
    %v1075 = vxor.u32 %v1073, 2147483648
    %v1076 = vmul.f32 %v1074, 1.442695
    %v1077 = vpow.pop %v1076
    %v1078 = vmul.f32 %v1075, 1.442695
    %v1079 = vpow.pop %v1078
    %v1080 = vadd.f32 %v1077, 1.0
    %v1081 = vadd.f32 %v1079, 1.0
    %v1082 = vrcp.pop %v1080
    %v1083 = vmul.f32 1.0, %v1082
    %v1084 = vrcp.pop %v1081
    %v1085 = vmul.f32 1.0, %v1084
    %vm1086 = vcmask 7168
    %1087 = vst.msk [vmem:[%s7] sm:$0xff] %vm1086, %v1083
    %1088 = vst.msk [vmem:[%s7 + $0x8] sm:$0xff] %vm1086, %v1085
    // Predicated region
    $region34: #{discriminator_forward.1} parent=1 // pred_check
      _
    $region35: #{discriminator_forward.1} parent=1 // pred_check_branch
      %1090 = sbr.rel (0) target = $region37
    $region36: #{discriminator_forward.1} parent=1 // pred_region
      _
    $region37: #{discriminator_forward.1} parent=1 // pred_fallthru
      _
    // Predicated region
    $region38: #{discriminator_forward.1} parent=1 // pred_check
      _
    $region39: #{discriminator_forward.1} parent=1 // pred_check_branch
      %1092 = sbr.rel (0) target = $region41
    $region40: #{discriminator_forward.1} parent=1 // pred_region
      _
    $region41: #{discriminator_forward.1} parent=1 // pred_fallthru
      _
    %1093 = vsyncpa [#allocation4], 1

</llo_original>
